<compile_context>
chip_gen: v6e
topology: v6e:2x2x1
jax: 0.10.0
libtpu: 0.0.40
codegen_flags: <defaults>
</compile_context>

<pallas_src>
import jax
import jax.numpy as jnp
from jax.experimental import pallas as pl
from jax.experimental.pallas import tpu as pltpu


def _identity_dma_kernel(y_hbm_ref, o_hbm_ref, copy_sem):
    # Single DMA: HBM -> HBM, no VMEM staging, no vector load/store slots.
    cp = pltpu.make_async_copy(y_hbm_ref, o_hbm_ref, copy_sem)
    cp.start()
    cp.wait()


def g_identity_forward(y: jax.Array) -> jax.Array:
    """Pallas kernel wrapper reproducing g_identity.forward(y) == y."""
    return pl.pallas_call(
        _identity_dma_kernel,
        out_shape=jax.ShapeDtypeStruct(y.shape, y.dtype),
        in_specs=[pl.BlockSpec(memory_space=pl.ANY)],   # leave input in HBM
        out_specs=pl.BlockSpec(memory_space=pl.ANY),    # write output in HBM
        scratch_shapes=[pltpu.SemaphoreType.DMA],       # DMA completion sem
    )(y)


def init_params(key):
    """Deterministic init of the (unused) fc: nn.Linear(1, 1, bias=False)."""
    # PyTorch default init: U(-1/sqrt(fan_in), 1/sqrt(fan_in)), fan_in = 1.
    w = jax.random.uniform(key, (1, 1), jnp.float32, minval=-1.0, maxval=1.0)
    return {"fc_weight": w}  # not used by forward (identity), kept for parity


if __name__ == "__main__":
    key = jax.random.PRNGKey(0)
    k_param, k_input = jax.random.split(key)

    params = init_params(k_param)  # unused in forward, as in the PyTorch module

    # Small example input: batch=8, features=16 (any shape works; forward is identity).
    y = jax.random.normal(k_input, (8, 16), dtype=jnp.float32)

    out = g_identity_forward(y)
    out = jax.block_until_ready(out)

    assert out.shape == y.shape and out.dtype == y.dtype
    assert bool(jnp.allclose(out, y)), "identity kernel mismatch"

    print("KERNEL_OK")
</pallas_src>

<mosaic_0001>
module attributes {stable_mosaic.version = 11 : i64} {
  func.func @_identity_dma_kernel(%arg0: memref<8x16xf32, #tpu.memory_space<any>>, %arg1: memref<8x16xf32, #tpu.memory_space<any>>, %arg2: memref<!tpu.dma_semaphore, #tpu.memory_space<semaphore_mem>>) attributes {dimension_semantics = [], scalar_prefetch = 0 : i64, scratch_operands = 1 : i64, tpu.core_type = #tpu.core_type<tc>} {
    tpu.enqueue_dma source(%arg0 : memref<8x16xf32, #tpu.memory_space<any>>) target(%arg1 : memref<8x16xf32, #tpu.memory_space<any>>) target_semaphore(%arg2 : memref<!tpu.dma_semaphore, #tpu.memory_space<semaphore_mem>>)
    tpu.wait_dma2 semaphore(%arg2 : memref<!tpu.dma_semaphore, #tpu.memory_space<semaphore_mem>>) src(%arg0 : memref<8x16xf32, #tpu.memory_space<any>>) dst(%arg1 : memref<8x16xf32, #tpu.memory_space<any>>)
    return
  }
}

</mosaic_0001>

<llo_original>
// kernel: tpu_custom_call.1
$region0: #{tpu_custom_call.1}
  #allocation0 [shape = 'u32[]', space=smem, size = 0x4, offset = 0x4, fixed_abs, tag = 'smem constant byte address 0x4 - core index']
  #allocation1 [shape = 'u32[144,128]{1,0:T(1,128)}', space=vmem, size = 0x12000, scoped, tag = 'internal scratch']
  #allocation2 [shape = 's32[1]{0}', space=sflag, size = 0x4, scoped, tag = 'scratch operand']
  #allocation3 [shape = 's32[]', space=sflag, size = 0x4, offset = 0, fixed_abs, tag = 'sflag constant byte address 0x0 - dummy sync flag']
  #allocation4 [shape = 'u32[0]{0}', space=smem, size = 0, offset = 0, fixed_abs, tag = 'smem constant byte address 0x0 - null']
  %s0 = inlined_call_operand.hbm [shape: f32[8,16], index: 0, kind: input, shape index: {}]
  %s1 = inlined_call_operand.hbm [shape: f32[8,16], index: 1, kind: output, shape index: {}]
  %s2 = sld [smem:[#allocation0]]
  $region2: #{tpu_custom_call.1} parent=0
    _
  %s4 = ssub.s32 1, %s2
  %s5 = scalar_select 0, %s4, %s2
  %s7 = sshll.u32 1, 14
  %s8 = sxor.u32 4294967295, %s7
  %12 = dma.general %s0, 128, %s1, [#allocation2], 131072, [#allocation4], 0, 0
  %s13 = smul.u32 8, 1
  %s14 = sshll.u32 %s13, 4
  %15 = dma.done [#allocation2], %s14
  %16 = vsyncmov [#allocation2]
  %s17 = vpop.sfrf %16
  %p18 = scmp.eq.s32.totalorder %s17, 0
  %p19 = pneg %p18
  %21 = shalt.err (%p19)

</llo_original>
